<compile_context>
chip_gen: v7x
topology: tpu7x:2x2x1
jax: 0.10.0
libtpu: 0.0.40
codegen_flags: <defaults>
</compile_context>

<pallas_src>
import functools

import numpy as np
import jax
import jax.numpy as jnp
from jax.experimental import pallas as pl
from jax.experimental.pallas import tpu as pltpu


def make_positional_encoding_table(max_len: int, d_model: int) -> jnp.ndarray:
    """Replicates the pe buffer from PositionalEncoding.__init__ (shape (max_len, d_model))."""
    position = np.arange(0, max_len, dtype=np.float32)[:, None]             # (max_len, 1)
    div_term = np.exp(
        np.arange(0, d_model, 2, dtype=np.float32) * (-np.log(10000.0) / d_model)
    )                                                                        # (d_model/2,)
    pe = np.zeros((max_len, d_model), dtype=np.float32)
    pe[:, 0::2] = np.sin(position * div_term)
    pe[:, 1::2] = np.cos(position * div_term)
    return jnp.asarray(pe)


def _pe_add_kernel(x_ref, pe_ref, o_ref, *, batch):
    # x_ref/o_ref: (TS, B*D) lane-dense slab; pe_ref: (TS, D)
    pe_wide = jnp.tile(pe_ref[...], (1, batch))          # replicate pe across batch
    o_ref[...] = x_ref[...] + pe_wide


def _pe_add_dropout_kernel(x_ref, pe_ref, m_ref, o_ref, *, batch):
    # m_ref holds keep_mask / (1 - p): 0 for dropped, 1/(1-p) for kept elements.
    pe_wide = jnp.tile(pe_ref[...], (1, batch))
    o_ref[...] = (x_ref[...] + pe_wide) * m_ref[...]


def _choose_ts(seq_len: int, row_bytes: int, target_bytes: int = 1 << 20) -> int:
    """Pick the per-step sequence tile: ~1 MiB per x block, multiple of 8 sublanes."""
    ts = max(1, target_bytes // max(1, row_bytes))
    if ts >= seq_len:
        return seq_len
    return max(8, (ts // 8) * 8)


def positional_encoding(x, pe_table, *, dropout_p=0.5, training=False, rng_key=None):
    """Forward pass of PositionalEncoding.

    x:        (S, B, D)
    pe_table: (max_len, D) precomputed sinusoidal table
    training: if False, dropout is the identity (eval mode).
    """
    S, B, D = x.shape
    dtype = x.dtype
    pe_slice = pe_table[:S].astype(dtype)                # (S, D), like pe[:x.size(0)]
    x2 = x.reshape(S, B * D)                             # free reshape -> lane-dense 2D slab

    ts = _choose_ts(S, B * D * x2.dtype.itemsize)
    grid = (pl.cdiv(S, ts),)

    x_spec = pl.BlockSpec((ts, B * D), lambda s: (s, 0))
    pe_spec = pl.BlockSpec((ts, D), lambda s: (s, 0))
    out_spec = pl.BlockSpec((ts, B * D), lambda s: (s, 0))
    out_shape = jax.ShapeDtypeStruct((S, B * D), dtype)
    cparams = pltpu.CompilerParams(
        dimension_semantics=("parallel",),               # no carried state -> shard across TCs
        vmem_limit_bytes=32 * 1024 * 1024,
    )

    p = float(dropout_p)
    apply_dropout = bool(training) and p > 0.0
    if apply_dropout and p >= 1.0:
        # Matches torch.nn.Dropout(p=1.0): everything is dropped.
        return jnp.zeros_like(x)

    if not apply_dropout:
        out2 = pl.pallas_call(
            functools.partial(_pe_add_kernel, batch=B),
            out_shape=out_shape,
            grid_spec=pltpu.PrefetchScalarGridSpec(
                num_scalar_prefetch=0,
                grid=grid,
                in_specs=[x_spec, pe_spec],
                out_specs=out_spec,
            ),
            compiler_params=cparams,
        )(x2, pe_slice)
    else:
        if rng_key is None:
            rng_key = jax.random.PRNGKey(0)
        keep_p = 1.0 - p
        # TODO(synk): dropout mask is drawn in plain JAX because pltpu.prng_seed /
        # prng_random_bits have no interpret-mode (CPU) lowering; the fused
        # add + mask*scale still runs inside the Pallas kernel.
        keep = jax.random.bernoulli(rng_key, keep_p, (S, B * D))
        mask = keep.astype(dtype) * jnp.asarray(1.0 / keep_p, dtype=dtype)
        out2 = pl.pallas_call(
            functools.partial(_pe_add_dropout_kernel, batch=B),
            out_shape=out_shape,
            grid_spec=pltpu.PrefetchScalarGridSpec(
                num_scalar_prefetch=0,
                grid=grid,
                in_specs=[x_spec, pe_spec, x_spec],      # mask tiled exactly like x
                out_specs=out_spec,
            ),
            compiler_params=cparams,
        )(x2, pe_slice, mask)

    return out2.reshape(S, B, D)


if __name__ == "__main__":
    D_MODEL = 32
    MAX_LEN = 5000
    S, B = 8, 2

    key = jax.random.PRNGKey(0)
    x = jax.random.normal(key, (S, B, D_MODEL), dtype=jnp.float32)

    pe_table = make_positional_encoding_table(MAX_LEN, D_MODEL)

    # Eval mode (dropout == identity): deterministic, check against pure-JAX reference.
    out_eval = positional_encoding(x, pe_table, dropout_p=0.5, training=False)
    jax.block_until_ready(out_eval)
    ref_eval = x + pe_table[:S][:, None, :]
    assert jnp.allclose(out_eval, ref_eval, atol=1e-6, rtol=1e-6), "eval-mode mismatch"

    # Training mode: exercises the in-kernel mask/scale path (deterministic given the key).
    out_train = positional_encoding(
        x, pe_table, dropout_p=0.5, training=True, rng_key=jax.random.PRNGKey(123)
    )
    jax.block_until_ready(out_train)
    # Sanity: surviving elements are (x + pe) / (1 - p), dropped elements are 0.
    scaled_ref = ref_eval * 2.0
    match = jnp.logical_or(
        jnp.isclose(out_train, 0.0, atol=1e-6),
        jnp.isclose(out_train, scaled_ref, atol=1e-5, rtol=1e-5),
    )
    assert bool(jnp.all(match)), "train-mode dropout mismatch"

    print("KERNEL_OK")
</pallas_src>

<mosaic_0001>
module attributes {stable_mosaic.version = 11 : i64} {
  func.func @_pe_add_kernel(%arg0: i32, %arg1: memref<8x64xf32, #tpu.memory_space<vmem>>, %arg2: memref<8x32xf32, #tpu.memory_space<vmem>>, %arg3: memref<8x64xf32, #tpu.memory_space<vmem>>) attributes {dimension_semantics = [#tpu.dimension_semantics<parallel>], iteration_bounds = array<i64: 1>, scalar_prefetch = 0 : i64, scratch_operands = 0 : i64, tpu.core_type = #tpu.core_type<tc>, window_params = [{transform_indices = @transform_0, window_bounds = array<i64: 8, 64>}, {transform_indices = @transform_1, window_bounds = array<i64: 8, 32>}, {transform_indices = @transform_2, window_bounds = array<i64: 8, 64>}]} {
    %c0 = arith.constant 0 : index
    %c0_0 = arith.constant 0 : index
    %0 = vector.load %arg2[%c0, %c0_0] : memref<8x32xf32, #tpu.memory_space<vmem>>, vector<8x32xf32>
    %1 = tpu.concatenate %0, %0 in 1 : vector<8x32xf32>, vector<8x32xf32> -> vector<8x64xf32>
    %c0_1 = arith.constant 0 : index
    %c0_2 = arith.constant 0 : index
    %2 = vector.load %arg1[%c0_1, %c0_2] : memref<8x64xf32, #tpu.memory_space<vmem>>, vector<8x64xf32>
    %3 = arith.addf %2, %1 : vector<8x64xf32>
    %c0_3 = arith.constant 0 : index
    %c0_4 = arith.constant 0 : index
    %4 = vector.load %arg3[%c0_3, %c0_4] : memref<8x64xf32, #tpu.memory_space<vmem>>, vector<8x64xf32>
    tpu.vector_store %arg3[%c0_3, %c0_4], %3 {strides = array<i32>} : memref<8x64xf32, #tpu.memory_space<vmem>>, vector<8x64xf32>,
    return
  }
  func.func @transform_0(%arg0: i32) -> (i32, i32) {
    %c0_i32 = arith.constant 0 : i32
    %c0_i32_0 = arith.constant 0 : i32
    return %arg0, %c0_i32 : i32, i32
  }
  func.func @transform_1(%arg0: i32) -> (i32, i32) {
    %c0_i32 = arith.constant 0 : i32
    %c0_i32_0 = arith.constant 0 : i32
    return %arg0, %c0_i32 : i32, i32
  }
  func.func @transform_2(%arg0: i32) -> (i32, i32) {
    %c0_i32 = arith.constant 0 : i32
    %c0_i32_0 = arith.constant 0 : i32
    return %arg0, %c0_i32 : i32, i32
  }
}

</mosaic_0001>

<llo_original>
// kernel: tpu_custom_call.1
$region0: #{tpu_custom_call.1}
  #allocation0 [shape = 'u32[]', space=smem, size = 0x4, offset = 0x4, fixed_abs, tag = 'smem constant byte address 0x4 - core index']
  #allocation1 [shape = 'u32[144,128]{1,0:T(1,128)}', space=vmem, size = 0x12000, scoped, tag = 'internal scratch']
  %s0 = inlined_call_operand.hbm [shape: f32[8,64], index: 0, kind: input, shape index: {}]
  %s1 = inlined_call_operand.hbm [shape: f32[8,32], index: 1, kind: input, shape index: {}]
  %s2 = inlined_call_operand.hbm [shape: f32[8,64], index: 2, kind: output, shape index: {}]
  %s3 = sld [smem:[#allocation0]]
  $region26: #{tpu_custom_call.1} parent=0
    _
  %s5 = ssub.s32 1, %s3
  %s6 = scalar_select 0, %s5, %s3
  $region1: #{tpu_custom_call.1} parent=0
    #allocation2 [shape = 'u8[4096]{0}', space=vmem, size = 0x1000, scoped, tag = 'input window, operand 0, single buffered']
    #allocation3 [shape = 's32[1]{0}', space=sflag, size = 0x4, scoped, tag = 'scoped memory for tpu_custom_call.1']
    #allocation4 [shape = 's32[1]{0}', space=sflag, size = 0x4, scoped, tag = 'scoped memory for tpu_custom_call.1']
    #allocation5 [shape = 'u8[4096]{0}', space=vmem, size = 0x1000, scoped, tag = 'input window, operand 1, single buffered']
    #allocation6 [shape = 's32[1]{0}', space=sflag, size = 0x4, scoped, tag = 'scoped memory for tpu_custom_call.1']
    #allocation7 [shape = 'u8[4096]{0}', space=vmem, size = 0x1000, scoped, tag = 'output window, operand 0, single buffered']
    %7 = vsyncpa [#allocation3], 0
    %8 = vsyncpa [#allocation6], 0
    %9 = vsyncpa [#allocation4], 0
    // Predicated region
    $region2: #{tpu_custom_call.1} parent=1 // pred_check
      _
    $region3: #{tpu_custom_call.1} parent=1 // pred_check_branch
      %11 = sbr.rel (0) target = $region5
    $region4: #{tpu_custom_call.1} parent=1 // pred_region
      %s13 = ssub.s32 128, 128
      %14 = vsyncadd [#allocation3], %s13
      %s16 = sshll.u32 [#allocation2], 4
      %s17 = int_to_ptr.vmem [resolvable:$true] %s16
      %19 = dma.hbm_to_vmem [thread:$0]  %s0, 128, %s17, [#allocation3]
    $region5: #{tpu_custom_call.1} parent=1 // pred_fallthru
      _
    // Predicated region
    $region6: #{tpu_custom_call.1} parent=1 // pred_check
      _
    $region7: #{tpu_custom_call.1} parent=1 // pred_check_branch
      %21 = sbr.rel (0) target = $region9
    $region8: #{tpu_custom_call.1} parent=1 // pred_region
      %s23 = ssub.s32 128, 128
      %24 = vsyncadd [#allocation6], %s23
      %s26 = sshll.u32 [#allocation5], 4
      %s27 = int_to_ptr.vmem [resolvable:$true] %s26
      %29 = dma.hbm_to_vmem [thread:$0]  %s1, 128, %s27, [#allocation6]
    $region9: #{tpu_custom_call.1} parent=1 // pred_fallthru
      _
    // Predicated region
    $region10: #{tpu_custom_call.1} parent=1 // pred_check
      _
    $region11: #{tpu_custom_call.1} parent=1 // pred_check_branch
      %31 = sbr.rel (0) target = $region13
    $region12: #{tpu_custom_call.1} parent=1 // pred_region
      %32 = dma.done [#allocation3], 128
    $region13: #{tpu_custom_call.1} parent=1 // pred_fallthru
      _
    // Predicated region
    $region14: #{tpu_custom_call.1} parent=1 // pred_check
      _
    $region15: #{tpu_custom_call.1} parent=1 // pred_check_branch
      %34 = sbr.rel (0) target = $region17
    $region16: #{tpu_custom_call.1} parent=1 // pred_region
      %35 = dma.done [#allocation6], 128
    $region17: #{tpu_custom_call.1} parent=1 // pred_fallthru
      _
    %v36 = vld [vmem:[#allocation5] sm:$0xff]
    %38 = vrot.lane.b32.xlu0 %v36, 32
    %v39 = vpop.permute.xlu0 %38
    %vm41 = vcmask 261120
    %v42 = vsel %vm41, %v36, %v39
    %v43 = vld [vmem:[#allocation2] sm:$0xff]
    %v44 = vadd.f32 %v43, %v42
    %vm45 = vcmask 523264
    %46 = vst.msk [vmem:[#allocation7] sm:$0xff] %vm45, %v44
    // Predicated region
    $region18: #{tpu_custom_call.1} parent=1 // pred_check
      _
    $region19: #{tpu_custom_call.1} parent=1 // pred_check_branch
      %48 = sbr.rel (0) target = $region21
    $region20: #{tpu_custom_call.1} parent=1 // pred_region
      %s50 = ssub.s32 128, 128
      %51 = vsyncadd [#allocation4], %s50
      %s53 = sshll.u32 [#allocation7], 4
      %s54 = int_to_ptr.vmem [resolvable:$true] %s53
      %56 = dma.vmem_to_hbm [thread:$0]  %s54, 128, %s2, [#allocation4]
    $region21: #{tpu_custom_call.1} parent=1 // pred_fallthru
      _
    // Predicated region
    $region22: #{tpu_custom_call.1} parent=1 // pred_check
      _
    $region23: #{tpu_custom_call.1} parent=1 // pred_check_branch
      %58 = sbr.rel (0) target = $region25
    $region24: #{tpu_custom_call.1} parent=1 // pred_region
      %59 = dma.done [#allocation4], 128
    $region25: #{tpu_custom_call.1} parent=1 // pred_fallthru
      _
    %60 = vsyncpa [#allocation3], 1
    %61 = vsyncpa [#allocation6], 1
    %62 = vsyncpa [#allocation4], 1

</llo_original>
